<compile_context>
chip_gen: v5e
topology: v5e:2x2
jax: 0.10.0
libtpu: 0.0.40
codegen_flags: <defaults>
</compile_context>

<pallas_src>
import math

import numpy as np
import jax
import jax.numpy as jnp
from jax.experimental import pallas as pl
from jax.experimental.pallas import tpu as pltpu

NUM_DROPOUTS = 6
DROP_P = 0.2
NUM_CLASSES = 3
LANES = 128      # class dim padded to a lane-dense 128-wide slab
SUBLANES = 16    # batch rows padded to a bf16-packed sublane multiple


def _round_up(x, m):
    return (x + m - 1) // m * m


# ---------------------------------------------------------------------------
# Kernel
# ---------------------------------------------------------------------------
def _multidp_head_kernel(x_ref, m1_ref, m2_ref, w1_ref, b1_ref, w2_ref, b2_ref,
                         out_ref):
    """Multi-sample-dropout prediction head (one batch tile).

    x_ref   : (TB, 4H)        bf16  concatenated [pooler, cls_-1, cls_-2, cls_-3]
    m1_ref  : (ND, TB, 4H)    bf16  outer dropout keep masks (0/1), one per branch
    m2_ref  : (ND, TB, H)     bf16  inner dropout keep masks (0/1)
    w1_ref  : (4H, H)         bf16  first Linear weight, pre-scaled by 1/keep_p
    b1_ref  : (1, H)          f32
    w2_ref  : (H, 128)        bf16  second Linear weight, pre-scaled by
                                    1/(keep_p*ND), zero-padded to 128 lanes
    b2_ref  : (1, 128)        f32   zero-padded to 128 lanes
    out_ref : (TB, 128)       f32
    """
    nd, tb, f4h = m1_ref.shape
    h_dim = w1_ref.shape[1]
    n_pad = w2_ref.shape[1]

    x = x_ref[...]                                            # (TB, 4H) bf16

    # Stack the ND dropout branches along the MXU M dimension: (ND*TB, 4H).
    # (TB is a multiple of 16, so the bf16 reshape is sublane-tile aligned.)
    xd = (m1_ref[...] * x[None]).reshape(nd * tb, f4h)        # bf16

    # Linear(4H -> H) + tanh.  bf16 MXU operands, fp32 accumulation; the
    # bias add and tanh stay fp32.
    h = jnp.tanh(
        jnp.dot(xd, w1_ref[...], preferred_element_type=jnp.float32)
        + b1_ref[...])                                        # (ND*TB, H) f32

    # Inner dropout mask at its real shape (ND*TB, H); the bf16 cast would be
    # needed for the second matmul anyway, and masks are exactly 0/1 in bf16.
    hd = h.astype(jnp.bfloat16) * m2_ref[...].reshape(nd * tb, h_dim)

    # Linear(H -> 3), lane-padded to 128 so the result pop / store are dense.
    y = jnp.dot(hd, w2_ref[...], preferred_element_type=jnp.float32)

    # Reduce the ND branch groups.  The 1/ND mean is folded into w2; b2 is
    # added once (== ND copies of b2/ND).
    out_ref[...] = y.reshape(nd, tb, n_pad).sum(axis=0) + b2_ref[...]


# ---------------------------------------------------------------------------
# Wrapper
# ---------------------------------------------------------------------------
def _dropout_masks(key, batch, f4h, h_dim):
    """0/1 keep masks (bf16-exact) for the 6 multi-sample-dropout branches."""
    keep_p = 1.0 - DROP_P
    k1, k2 = jax.random.split(key)
    m1 = jax.random.bernoulli(k1, keep_p, (NUM_DROPOUTS, batch, f4h))
    m2 = jax.random.bernoulli(k2, keep_p, (NUM_DROPOUTS, batch, h_dim))
    return m1.astype(jnp.bfloat16), m2.astype(jnp.bfloat16)


def ernie_multidp_head(pooler_output, hid_m1, hid_m2, hid_m3, params, key,
                       training=True):
    """cat(BERT outputs) -> multi-sample-dropout classification head."""
    # cat([pooler, h[-1][:,0], h[-2][:,0], h[-3][:,0]], dim=1) -> [B, 4H]
    # TODO(synk): could be moved in-kernel (4 inputs + split w1) to avoid one
    # tiny HBM round trip; kept in XLA since the masks already come from here.
    cat = jnp.concatenate(
        [pooler_output, hid_m1[:, 0], hid_m2[:, 0], hid_m3[:, 0]],
        axis=1).astype(jnp.bfloat16)
    b, f4h = cat.shape
    w1, b1, w2, b2 = params
    h_dim = w1.shape[1]
    keep_p = 1.0 - DROP_P

    # Eval mode: dropout is identity, the 6 branches collapse to one.
    nd = NUM_DROPOUTS if training else 1

    # Pad the batch so (a) bf16 branch stacking is sublane-tile aligned and
    # (b) the batch tile divides the padded batch exactly (no partial blocks).
    b_pad = _round_up(max(b, 1), SUBLANES)
    tile_b = min(b_pad, 128)
    b_pad = _round_up(b_pad, tile_b)

    if training:
        m1, m2 = _dropout_masks(key, b, f4h, h_dim)
        if b_pad != b:
            m1 = jnp.pad(m1, ((0, 0), (0, b_pad - b), (0, 0)))
            m2 = jnp.pad(m2, ((0, 0), (0, b_pad - b), (0, 0)))
        # Fold dropout scales + the 1/ND mean into the weights (done once).
        w1_s = w1 * (1.0 / keep_p)
        w2_s = w2 * (1.0 / (keep_p * nd))
    else:
        m1 = jnp.ones((nd, b_pad, f4h), jnp.bfloat16)
        m2 = jnp.ones((nd, b_pad, h_dim), jnp.bfloat16)
        w1_s = w1
        w2_s = w2 * (1.0 / nd)

    if b_pad != b:
        cat = jnp.pad(cat, ((0, b_pad - b), (0, 0)))

    # Lane-dense second projection / output: pad the 3-class dim to 128 lanes.
    # Weights are pre-cast to bf16 once here (they were cast in-kernel before).
    w1_b = w1_s.astype(jnp.bfloat16)
    w2_p = jnp.zeros((h_dim, LANES), jnp.float32).at[:, :NUM_CLASSES].set(w2_s)
    w2_b = w2_p.astype(jnp.bfloat16)
    b2_p = jnp.zeros((1, LANES), jnp.float32).at[0, :NUM_CLASSES].set(b2)
    b1_r = b1.reshape(1, h_dim).astype(jnp.float32)

    # Batch grid: shards rows across TensorCores (v7x) and pipelines x / mask
    # tiles; after branch-stacking the MXU sees M = nd * tile_b rows per push.
    grid = (b_pad // tile_b,)

    out_padded = pl.pallas_call(
        _multidp_head_kernel,
        out_shape=jax.ShapeDtypeStruct((b_pad, LANES), jnp.float32),
        grid=grid,
        in_specs=[
            pl.BlockSpec((tile_b, f4h), lambda i: (i, 0)),           # x
            pl.BlockSpec((nd, tile_b, f4h), lambda i: (0, i, 0)),    # outer masks
            pl.BlockSpec((nd, tile_b, h_dim), lambda i: (0, i, 0)),  # inner masks
            pl.BlockSpec((f4h, h_dim), lambda i: (0, 0)),            # w1 (pinned)
            pl.BlockSpec((1, h_dim), lambda i: (0, 0)),              # b1
            pl.BlockSpec((h_dim, LANES), lambda i: (0, 0)),          # w2 (padded)
            pl.BlockSpec((1, LANES), lambda i: (0, 0)),              # b2 (padded)
        ],
        out_specs=pl.BlockSpec((tile_b, LANES), lambda i: (i, 0)),
        compiler_params=pltpu.CompilerParams(
            dimension_semantics=("parallel",)),
    )(cat, m1, m2, w1_b, b1_r, w2_b, b2_p)

    return out_padded[:b, :NUM_CLASSES]


# ---------------------------------------------------------------------------
# Parameter init (matches init_model_weights: xavier_uniform weights, 0 bias)
# ---------------------------------------------------------------------------
def _xavier_uniform(key, fan_in, fan_out):
    limit = math.sqrt(6.0 / (fan_in + fan_out))
    # Stored as (in, out); kernel computes x @ W (xavier is layout-symmetric).
    return jax.random.uniform(key, (fan_in, fan_out), jnp.float32,
                              minval=-limit, maxval=limit)


def init_predict_fc_params(key, hidden_size):
    k1, k2 = jax.random.split(key)
    w1 = _xavier_uniform(k1, 4 * hidden_size, hidden_size)
    b1 = jnp.zeros((hidden_size,), jnp.float32)
    w2 = _xavier_uniform(k2, hidden_size, NUM_CLASSES)
    b2 = jnp.zeros((NUM_CLASSES,), jnp.float32)
    return (w1, b1, w2, b2)


# ---------------------------------------------------------------------------
# Pure-JAX reference (fp32) for correctness checking
# ---------------------------------------------------------------------------
def _reference_head(cat, params, masks, training):
    w1, b1, w2, b2 = params
    keep_p = 1.0 - DROP_P
    if not training:
        h = jnp.tanh(cat @ w1 + b1)
        return h @ w2 + b2
    m1 = masks[0].astype(jnp.float32)
    m2 = masks[1].astype(jnp.float32)
    acc = jnp.zeros((cat.shape[0], NUM_CLASSES), jnp.float32)
    for i in range(NUM_DROPOUTS):
        xd = cat * m1[i] / keep_p
        h = jnp.tanh(xd @ w1 + b1)
        hd = h * m2[i] / keep_p
        acc = acc + hd @ w2 + b2
    return acc / NUM_DROPOUTS


if __name__ == "__main__":
    # Small, deterministic test shapes: batch=2, seq=8, hidden=32 (=> 4H = 128)
    B, S, H = 2, 8, 32
    key = jax.random.PRNGKey(0)
    k_pool, k_h1, k_h2, k_h3, k_params, k_drop = jax.random.split(key, 6)

    # Stand-ins for BertModel outputs (see TODO above).
    pooler_output = jax.random.normal(k_pool, (B, H), jnp.float32)
    hid_m1 = jax.random.normal(k_h1, (B, S, H), jnp.float32)
    hid_m2 = jax.random.normal(k_h2, (B, S, H), jnp.float32)
    hid_m3 = jax.random.normal(k_h3, (B, S, H), jnp.float32)
    params = init_predict_fc_params(k_params, H)

    cat_ref = jnp.concatenate(
        [pooler_output, hid_m1[:, 0], hid_m2[:, 0], hid_m3[:, 0]],
        axis=1).astype(jnp.float32)

    # Training mode: multi-sample dropout active (same masks as the kernel).
    out_train = ernie_multidp_head(pooler_output, hid_m1, hid_m2, hid_m3,
                                   params, key=k_drop, training=True)
    out_train = jax.block_until_ready(out_train)
    assert out_train.shape == (B, NUM_CLASSES) and out_train.dtype == jnp.float32
    masks = _dropout_masks(k_drop, B, 4 * H, H)
    ref_train = _reference_head(cat_ref, params, masks, training=True)
    np.testing.assert_allclose(np.asarray(out_train), np.asarray(ref_train),
                               rtol=5e-2, atol=5e-2)

    # Eval mode: dropout is identity; all 6 branches collapse to one.
    out_eval = ernie_multidp_head(pooler_output, hid_m1, hid_m2, hid_m3,
                                  params, key=k_drop, training=False)
    out_eval = jax.block_until_ready(out_eval)
    ref_eval = _reference_head(cat_ref, params, None, training=False)
    np.testing.assert_allclose(np.asarray(out_eval), np.asarray(ref_eval),
                               rtol=5e-2, atol=5e-2)

    assert bool(jnp.all(jnp.isfinite(out_train)))
    print("KERNEL_OK")
</pallas_src>

<mosaic_0001>
module attributes {stable_mosaic.version = 11 : i64} {
  func.func @_multidp_head_kernel(%arg0: i32, %arg1: memref<16x128xbf16, #tpu.memory_space<vmem>>, %arg2: memref<6x16x128xbf16, #tpu.memory_space<vmem>>, %arg3: memref<6x16x32xbf16, #tpu.memory_space<vmem>>, %arg4: memref<128x32xbf16, #tpu.memory_space<vmem>>, %arg5: memref<1x32xf32, #tpu.memory_space<vmem>>, %arg6: memref<32x128xbf16, #tpu.memory_space<vmem>>, %arg7: memref<1x128xf32, #tpu.memory_space<vmem>>, %arg8: memref<16x128xf32, #tpu.memory_space<vmem>>) attributes {dimension_semantics = [#tpu.dimension_semantics<parallel>], iteration_bounds = array<i64: 1>, scalar_prefetch = 0 : i64, scratch_operands = 0 : i64, tpu.core_type = #tpu.core_type<tc>, window_params = [{transform_indices = @transform_0, window_bounds = array<i64: 16, 128>}, {transform_indices = @transform_1, window_bounds = array<i64: 6, 16, 128>}, {transform_indices = @transform_2, window_bounds = array<i64: 6, 16, 32>}, {pipeline_mode = #tpu.pipeline_mode<synchronous>, transform_indices = @transform_3, window_bounds = array<i64: 128, 32>}, {pipeline_mode = #tpu.pipeline_mode<synchronous>, transform_indices = @transform_4, window_bounds = array<i64: 1, 32>}, {pipeline_mode = #tpu.pipeline_mode<synchronous>, transform_indices = @transform_5, window_bounds = array<i64: 32, 128>}, {pipeline_mode = #tpu.pipeline_mode<synchronous>, transform_indices = @transform_6, window_bounds = array<i64: 1, 128>}, {transform_indices = @transform_7, window_bounds = array<i64: 16, 128>}]} {
    %c0 = arith.constant 0 : index
    %c0_0 = arith.constant 0 : index
    %0 = vector.load %arg1[%c0, %c0_0] : memref<16x128xbf16, #tpu.memory_space<vmem>>, vector<16x128xbf16>
    %c0_1 = arith.constant 0 : index
    %c0_2 = arith.constant 0 : index
    %c0_3 = arith.constant 0 : index
    %1 = vector.load %arg2[%c0_1, %c0_2, %c0_3] : memref<6x16x128xbf16, #tpu.memory_space<vmem>>, vector<6x16x128xbf16>
    %2 = vector.shape_cast %0 : vector<16x128xbf16> to vector<1x16x128xbf16>
    %3 = vector.broadcast %2 : vector<1x16x128xbf16> to vector<6x16x128xbf16>
    %4 = arith.mulf %1, %3 : vector<6x16x128xbf16>
    %5 = vector.shape_cast %4 : vector<6x16x128xbf16> to vector<96x128xbf16>
    %c0_4 = arith.constant 0 : index
    %c0_5 = arith.constant 0 : index
    %6 = vector.load %arg4[%c0_4, %c0_5] : memref<128x32xbf16, #tpu.memory_space<vmem>>, vector<128x32xbf16>
    %cst = arith.constant dense<0.000000e+00> : vector<96x32xf32>
    %7 = tpu.matmul %5, %6, %cst {dimension_numbers = #tpu.dot_dimension_numbers<[1], [0], [0], [1], [0, 0, 1, 1], [], []>} : vector<96x128xbf16>, vector<128x32xbf16>, vector<96x32xf32> -> vector<96x32xf32>
    %c0_6 = arith.constant 0 : index
    %c0_7 = arith.constant 0 : index
    %8 = vector.load %arg5[%c0_6, %c0_7] : memref<1x32xf32, #tpu.memory_space<vmem>>, vector<1x32xf32>
    %9 = vector.broadcast %8 : vector<1x32xf32> to vector<96x32xf32>
    %10 = arith.addf %7, %9 : vector<96x32xf32>
    %11 = math.tanh %10 : vector<96x32xf32>
    %12 = arith.truncf %11 : vector<96x32xf32> to vector<96x32xbf16>
    %c0_8 = arith.constant 0 : index
    %c0_9 = arith.constant 0 : index
    %c0_10 = arith.constant 0 : index
    %13 = vector.load %arg3[%c0_8, %c0_9, %c0_10] : memref<6x16x32xbf16, #tpu.memory_space<vmem>>, vector<6x16x32xbf16>
    %14 = vector.shape_cast %13 : vector<6x16x32xbf16> to vector<96x32xbf16>
    %15 = arith.mulf %12, %14 : vector<96x32xbf16>
    %c0_11 = arith.constant 0 : index
    %c0_12 = arith.constant 0 : index
    %16 = vector.load %arg6[%c0_11, %c0_12] : memref<32x128xbf16, #tpu.memory_space<vmem>>, vector<32x128xbf16>
    %cst_13 = arith.constant dense<0.000000e+00> : vector<96x128xf32>
    %17 = tpu.matmul %15, %16, %cst_13 {dimension_numbers = #tpu.dot_dimension_numbers<[1], [0], [0], [1], [0, 0, 1, 1], [], []>} : vector<96x32xbf16>, vector<32x128xbf16>, vector<96x128xf32> -> vector<96x128xf32>
    %18 = vector.shape_cast %17 : vector<96x128xf32> to vector<6x16x128xf32>
    %cst_14 = arith.constant dense<0.000000e+00> : vector<16x128xf32>
    %19 = vector.multi_reduction <add>, %18, %cst_14 [0] : vector<6x16x128xf32> to vector<16x128xf32>
    %c0_15 = arith.constant 0 : index
    %c0_16 = arith.constant 0 : index
    %20 = vector.load %arg7[%c0_15, %c0_16] : memref<1x128xf32, #tpu.memory_space<vmem>>, vector<1x128xf32>
    %21 = vector.broadcast %20 : vector<1x128xf32> to vector<16x128xf32>
    %22 = arith.addf %19, %21 : vector<16x128xf32>
    %c0_17 = arith.constant 0 : index
    %c0_18 = arith.constant 0 : index
    %23 = vector.load %arg8[%c0_17, %c0_18] : memref<16x128xf32, #tpu.memory_space<vmem>>, vector<16x128xf32>
    tpu.vector_store %arg8[%c0_17, %c0_18], %22 {strides = array<i32>} : memref<16x128xf32, #tpu.memory_space<vmem>>, vector<16x128xf32>,
    return
  }
  func.func @transform_0(%arg0: i32) -> (i32, i32) {
    %c0_i32 = arith.constant 0 : i32
    %c0_i32_0 = arith.constant 0 : i32
    return %arg0, %c0_i32 : i32, i32
  }
  func.func @transform_1(%arg0: i32) -> (i32, i32, i32) {
    %c0_i32 = arith.constant 0 : i32
    %c0_i32_0 = arith.constant 0 : i32
    %c0_i32_1 = arith.constant 0 : i32
    return %c0_i32, %arg0, %c0_i32_0 : i32, i32, i32
  }
  func.func @transform_2(%arg0: i32) -> (i32, i32, i32) {
    %c0_i32 = arith.constant 0 : i32
    %c0_i32_0 = arith.constant 0 : i32
    %c0_i32_1 = arith.constant 0 : i32
    return %c0_i32, %arg0, %c0_i32_0 : i32, i32, i32
  }
  func.func @transform_3(%arg0: i32) -> (i32, i32) {
    %c0_i32 = arith.constant 0 : i32
    %c0_i32_0 = arith.constant 0 : i32
    %c0_i32_1 = arith.constant 0 : i32
    return %c0_i32, %c0_i32_0 : i32, i32
  }
  func.func @transform_4(%arg0: i32) -> (i32, i32) {
    %c0_i32 = arith.constant 0 : i32
    %c0_i32_0 = arith.constant 0 : i32
    %c0_i32_1 = arith.constant 0 : i32
    return %c0_i32, %c0_i32_0 : i32, i32
  }
  func.func @transform_5(%arg0: i32) -> (i32, i32) {
    %c0_i32 = arith.constant 0 : i32
    %c0_i32_0 = arith.constant 0 : i32
    %c0_i32_1 = arith.constant 0 : i32
    return %c0_i32, %c0_i32_0 : i32, i32
  }
  func.func @transform_6(%arg0: i32) -> (i32, i32) {
    %c0_i32 = arith.constant 0 : i32
    %c0_i32_0 = arith.constant 0 : i32
    %c0_i32_1 = arith.constant 0 : i32
    return %c0_i32, %c0_i32_0 : i32, i32
  }
  func.func @transform_7(%arg0: i32) -> (i32, i32) {
    %c0_i32 = arith.constant 0 : i32
    %c0_i32_0 = arith.constant 0 : i32
    return %arg0, %c0_i32 : i32, i32
  }
}

</mosaic_0001>

<llo_original>
// kernel: tpu_custom_call.1
$region0: #{tpu_custom_call.1}
  #allocation0 [shape = 'u32[]', space=smem, size = 0x4, offset = 0x4, fixed_abs, tag = 'smem constant byte address 0x4 - core index']
  #allocation1 [shape = 'u32[72,128]{1,0:T(1,128)}', space=vmem, size = 0x9000, scoped, tag = 'internal scratch']
  %s0 = inlined_call_operand.vmem [shape: bf16[16,128], index: 0, kind: input, shape index: {}]
  %s1 = inlined_call_operand.vmem [shape: bf16[6,16,128], index: 1, kind: input, shape index: {}]
  %s2 = inlined_call_operand.hbm [shape: bf16[6,16,32], index: 2, kind: input, shape index: {}]
  %s3 = inlined_call_operand.vmem [shape: bf16[128,32], index: 3, kind: input, shape index: {}]
  %s4 = inlined_call_operand.vmem [shape: f32[1,32], index: 4, kind: input, shape index: {}]
  %s5 = inlined_call_operand.vmem [shape: bf16[32,128], index: 5, kind: input, shape index: {}]
  %s6 = inlined_call_operand.vmem [shape: f32[1,128], index: 6, kind: input, shape index: {}]
  %s7 = inlined_call_operand.hbm [shape: f32[16,128], index: 7, kind: output, shape index: {}]
  %s8 = sld [smem:[#allocation0]]
  $region42: #{tpu_custom_call.1} parent=0
    _
  %s10 = ssub.s32 1, %s8
  %s11 = scalar_select 0, %s10, %s8
  $region1: #{tpu_custom_call.1} parent=0
    #allocation2 [shape = 'u8[24576]{0}', space=vmem, size = 0x6000, scoped, tag = 'input window, operand 2, single buffered']
    #allocation3 [shape = 's32[1]{0}', space=sflag, size = 0x4, scoped, tag = 'scoped memory for tpu_custom_call.1']
    #allocation4 [shape = 's32[1]{0}', space=sflag, size = 0x4, scoped, tag = 'scoped memory for tpu_custom_call.1']
    #allocation5 [shape = 'u8[8192]{0}', space=vmem, size = 0x2000, scoped, tag = 'output window, operand 0, single buffered']
    %12 = vsyncpa [#allocation3], 0
    %13 = vsyncpa [#allocation4], 0
    // Predicated region
    $region2: #{tpu_custom_call.1} parent=1 // pred_check
      _
    $region3: #{tpu_custom_call.1} parent=1 // pred_check_branch
      %15 = sbr.rel (0) target = $region5
    $region4: #{tpu_custom_call.1} parent=1 // pred_region
      _
    $region5: #{tpu_custom_call.1} parent=1 // pred_fallthru
      _
    // Predicated region
    $region6: #{tpu_custom_call.1} parent=1 // pred_check
      _
    $region7: #{tpu_custom_call.1} parent=1 // pred_check_branch
      %17 = sbr.rel (0) target = $region9
    $region8: #{tpu_custom_call.1} parent=1 // pred_region
      _
    $region9: #{tpu_custom_call.1} parent=1 // pred_fallthru
      _
    // Predicated region
    $region10: #{tpu_custom_call.1} parent=1 // pred_check
      _
    $region11: #{tpu_custom_call.1} parent=1 // pred_check_branch
      %19 = sbr.rel (0) target = $region13
    $region12: #{tpu_custom_call.1} parent=1 // pred_region
      %21 = vsyncadd [#allocation3], 0
      %s22 = sshll.u32 %s2, 4
      %s23 = int_to_ptr.hbm [resolvable:$true] %s22
      %s24 = sshll.u32 [#allocation2], 4
      %s25 = int_to_ptr.vmem [resolvable:$true] %s24
      %30 = dma.hbm_to_vmem [thread:$0]  %s23, 768, %s25, [#allocation3], 64, 64, 4
    $region13: #{tpu_custom_call.1} parent=1 // pred_fallthru
      _
    // Predicated region
    $region14: #{tpu_custom_call.1} parent=1 // pred_check
      _
    $region15: #{tpu_custom_call.1} parent=1 // pred_check_branch
      %32 = sbr.rel (0) target = $region17
    $region16: #{tpu_custom_call.1} parent=1 // pred_region
      _
    $region17: #{tpu_custom_call.1} parent=1 // pred_fallthru
      _
    // Predicated region
    $region18: #{tpu_custom_call.1} parent=1 // pred_check
      _
    $region19: #{tpu_custom_call.1} parent=1 // pred_check_branch
      %34 = sbr.rel (0) target = $region21
    $region20: #{tpu_custom_call.1} parent=1 // pred_region
      _
    $region21: #{tpu_custom_call.1} parent=1 // pred_fallthru
      _
    // Predicated region
    $region22: #{tpu_custom_call.1} parent=1 // pred_check
      _
    $region23: #{tpu_custom_call.1} parent=1 // pred_check_branch
      %36 = sbr.rel (0) target = $region25
    $region24: #{tpu_custom_call.1} parent=1 // pred_region
      _
    $region25: #{tpu_custom_call.1} parent=1 // pred_fallthru
      _
    // Predicated region
    $region26: #{tpu_custom_call.1} parent=1 // pred_check
      _
    $region27: #{tpu_custom_call.1} parent=1 // pred_check_branch
      %38 = sbr.rel (0) target = $region29
    $region28: #{tpu_custom_call.1} parent=1 // pred_region
      _
    $region29: #{tpu_custom_call.1} parent=1 // pred_fallthru
      _
    // Predicated region
    $region30: #{tpu_custom_call.1} parent=1 // pred_check
      _
    $region31: #{tpu_custom_call.1} parent=1 // pred_check_branch
      %40 = sbr.rel (0) target = $region33
    $region32: #{tpu_custom_call.1} parent=1 // pred_region
      %42 = dma.done [#allocation3], 768
    $region33: #{tpu_custom_call.1} parent=1 // pred_fallthru
      _
    %v44 = vld [vmem:[%s0] sm:$0xf]
    %v45 = vld [vmem:[%s0 + $0x4] sm:$0xf]
    %v46 = vld [vmem:[%s1] sm:$0xf]
    %v47 = vld [vmem:[%s1 + $0x4] sm:$0xf]
    %v48 = vld [vmem:[%s1 + $0x8] sm:$0xf]
    %v49 = vld [vmem:[%s1 + $0xc] sm:$0xf]
    %v50 = vld [vmem:[%s1 + $0x10] sm:$0xf]
    %v51 = vld [vmem:[%s1 + $0x14] sm:$0xf]
    %v52 = vld [vmem:[%s1 + $0x18] sm:$0xf]
    %v53 = vld [vmem:[%s1 + $0x1c] sm:$0xf]
    %v54 = vld [vmem:[%s1 + $0x20] sm:$0xf]
    %v55 = vld [vmem:[%s1 + $0x24] sm:$0xf]
    %v56 = vld [vmem:[%s1 + $0x28] sm:$0xf]
    %v57 = vld [vmem:[%s1 + $0x2c] sm:$0xf]
    %v58 = vunpack.c.l.bf16 %v46
    %v59 = vunpack.c.l.bf16 %v47
    %v60 = vunpack.c.l.bf16 %v48
    %v61 = vunpack.c.l.bf16 %v49
    %v62 = vunpack.c.l.bf16 %v50
    %v63 = vunpack.c.l.bf16 %v51
    %v64 = vunpack.c.l.bf16 %v52
    %v65 = vunpack.c.l.bf16 %v53
    %v66 = vunpack.c.l.bf16 %v54
    %v67 = vunpack.c.l.bf16 %v55
    %v68 = vunpack.c.l.bf16 %v56
    %v69 = vunpack.c.l.bf16 %v57
    %v70 = vunpack.c.l.bf16 %v44
    %v71 = vunpack.c.l.bf16 %v45
    %v72 = vmul.f32 %v58, %v70
    %v73 = vmul.f32 %v59, %v71
    %v74 = vmul.f32 %v60, %v70
    %v75 = vmul.f32 %v61, %v71
    %v76 = vmul.f32 %v62, %v70
    %v77 = vmul.f32 %v63, %v71
    %v78 = vmul.f32 %v64, %v70
    %v79 = vmul.f32 %v65, %v71
    %v80 = vmul.f32 %v66, %v70
    %v81 = vmul.f32 %v67, %v71
    %v82 = vmul.f32 %v68, %v70
    %v83 = vmul.f32 %v69, %v71
    %v84 = vpack.c.bf16 %v72, %v72
    %v85 = vpack.c.bf16 %v73, %v73
    %v86 = vpack.c.bf16 %v74, %v74
    %v87 = vpack.c.bf16 %v75, %v75
    %v88 = vpack.c.bf16 %v76, %v76
    %v89 = vpack.c.bf16 %v77, %v77
    %v90 = vpack.c.bf16 %v78, %v78
    %v91 = vpack.c.bf16 %v79, %v79
    %v92 = vpack.c.bf16 %v80, %v80
    %v93 = vpack.c.bf16 %v81, %v81
    %v94 = vpack.c.bf16 %v82, %v82
    %v95 = vpack.c.bf16 %v83, %v83
    %v96 = vld [vmem:[%s3] sm:$0xf]
    %v97 = vld [vmem:[%s3 + $0x4] sm:$0xf]
    %v98 = vld [vmem:[%s3 + $0x8] sm:$0xf]
    %v99 = vld [vmem:[%s3 + $0xc] sm:$0xf]
    %v100 = vld [vmem:[%s3 + $0x10] sm:$0xf]
    %v101 = vld [vmem:[%s3 + $0x14] sm:$0xf]
    %v102 = vld [vmem:[%s3 + $0x18] sm:$0xf]
    %v103 = vld [vmem:[%s3 + $0x1c] sm:$0xf]
    %v104 = vld [vmem:[%s3 + $0x20] sm:$0xf]
    %v105 = vld [vmem:[%s3 + $0x24] sm:$0xf]
    %v106 = vld [vmem:[%s3 + $0x28] sm:$0xf]
    %v107 = vld [vmem:[%s3 + $0x2c] sm:$0xf]
    %v108 = vld [vmem:[%s3 + $0x30] sm:$0xf]
    %v109 = vld [vmem:[%s3 + $0x34] sm:$0xf]
    %v110 = vld [vmem:[%s3 + $0x38] sm:$0xf]
    %v111 = vld [vmem:[%s3 + $0x3c] sm:$0xf]
    %v112 = vld [vmem:[%s4] sm:$0x1]
    %v114 = vperm.slane %v112, 0
    %v128 = vunpack.c.l.b16 %v84
    %v129 = vunpack.c.l.b16 %v85
    %v130 = vunpack.c.l.b16 %v86
    %v131 = vunpack.c.l.b16 %v87
    %v132 = vunpack.c.l.b16 %v88
    %v133 = vunpack.c.l.b16 %v89
    %v134 = vunpack.c.l.b16 %v90
    %v135 = vunpack.c.l.b16 %v91
    %v136 = vunpack.c.l.b16 %v92
    %v137 = vunpack.c.l.b16 %v93
    %v138 = vunpack.c.l.b16 %v94
    %v139 = vunpack.c.l.b16 %v95
    %v140 = vpack.c.b16 %v129, %v128
    %v141 = vpack.c.b16 %v131, %v130
    %v142 = vpack.c.b16 %v133, %v132
    %v143 = vpack.c.b16 %v135, %v134
    %v144 = vpack.c.b16 %v137, %v136
    %v145 = vpack.c.b16 %v139, %v138
    %v168 = vunpack.c.l.b16 %v96
    %v169 = vunpack.c.l.b16 %v97
    %v170 = vunpack.c.l.b16 %v98
    %v171 = vunpack.c.l.b16 %v99
    %v172 = vunpack.c.l.b16 %v100
    %v173 = vunpack.c.l.b16 %v101
    %v174 = vunpack.c.l.b16 %v102
    %v175 = vunpack.c.l.b16 %v103
    %v176 = vunpack.c.l.b16 %v104
    %v177 = vunpack.c.l.b16 %v105
    %v178 = vunpack.c.l.b16 %v106
    %v179 = vunpack.c.l.b16 %v107
    %v180 = vunpack.c.l.b16 %v108
    %v181 = vunpack.c.l.b16 %v109
    %v182 = vunpack.c.l.b16 %v110
    %v183 = vunpack.c.l.b16 %v111
    %v184 = vpack.c.b16 %v169, %v168
    %v185 = vpack.c.b16 %v171, %v170
    %v186 = vpack.c.b16 %v173, %v172
    %v187 = vpack.c.b16 %v175, %v174
    %v188 = vpack.c.b16 %v177, %v176
    %v189 = vpack.c.b16 %v179, %v178
    %v190 = vpack.c.b16 %v181, %v180
    %v191 = vpack.c.b16 %v183, %v182
    %200 = vmatpush.bf16.msra.mxu0 %v191
    %201 = vmatpush.bf16.msra.mxu0 %v190
    %202 = vmatpush.bf16.msra.mxu0 %v189
    %203 = vmatpush.bf16.msra.mxu0 %v188
    %204 = vmatpush.bf16.msra.mxu0 %v187
    %205 = vmatpush.bf16.msra.mxu0 %v186
    %206 = vmatpush.bf16.msra.mxu0 %v185
    %207 = vmatpush.bf16.msra.mxu0 %v184
    %208 = vmatmul.bf16.gmra.mxu0 %v140
    %v209 = vpop.f32.mrf.mxu0
    %v210 = vadd.f32 %v114, %v209
    %v211 = vpop.f32.mrf.mxu0
    %v212 = vadd.f32 %v114, %v211
    %213 = vmatmul.bf16.gmra.mxu0 %v141
    %v214 = vpop.f32.mrf.mxu0
    %v215 = vadd.f32 %v114, %v214
    %v216 = vpop.f32.mrf.mxu0
    %v217 = vadd.f32 %v114, %v216
    %218 = vmatmul.bf16.gmra.mxu0 %v142
    %v219 = vpop.f32.mrf.mxu0
    %v220 = vadd.f32 %v114, %v219
    %v221 = vpop.f32.mrf.mxu0
    %v222 = vadd.f32 %v114, %v221
    %223 = vmatmul.bf16.gmra.mxu0 %v143
    %v224 = vpop.f32.mrf.mxu0
    %v225 = vadd.f32 %v114, %v224
    %v226 = vpop.f32.mrf.mxu0
    %v227 = vadd.f32 %v114, %v226
    %228 = vmatmul.bf16.gmra.mxu0 %v144
    %v229 = vpop.f32.mrf.mxu0
    %v230 = vadd.f32 %v114, %v229
    %v231 = vpop.f32.mrf.mxu0
    %v232 = vadd.f32 %v114, %v231
    %233 = vmatmul.bf16.gmra.mxu0 %v145
    %v234 = vpop.f32.mrf.mxu0
    %v235 = vadd.f32 %v114, %v234
    %v236 = vpop.f32.mrf.mxu0
    %v237 = vadd.f32 %v114, %v236
    %238 = vdwg.mxu0
    %v239 = vtanh.pop %v210
    %v240 = vtanh.pop %v212
    %v241 = vtanh.pop %v215
    %v242 = vtanh.pop %v217
    %v243 = vtanh.pop %v220
    %v244 = vtanh.pop %v222
    %v245 = vtanh.pop %v225
    %v246 = vtanh.pop %v227
    %v247 = vtanh.pop %v230
    %v248 = vtanh.pop %v232
    %v249 = vtanh.pop %v235
    %v250 = vtanh.pop %v237
    %v251 = vpack.c.bf16 %v239, %v239
    %v252 = vpack.c.bf16 %v240, %v240
    %v253 = vpack.c.bf16 %v241, %v241
    %v254 = vpack.c.bf16 %v242, %v242
    %v255 = vpack.c.bf16 %v243, %v243
    %v256 = vpack.c.bf16 %v244, %v244
    %v257 = vpack.c.bf16 %v245, %v245
    %v258 = vpack.c.bf16 %v246, %v246
    %v259 = vpack.c.bf16 %v247, %v247
    %v260 = vpack.c.bf16 %v248, %v248
    %v261 = vpack.c.bf16 %v249, %v249
    %v262 = vpack.c.bf16 %v250, %v250
    %v263 = vld [vmem:[#allocation2] sm:$0xf]
    %v264 = vld [vmem:[#allocation2 + $0x4] sm:$0xf]
    %v265 = vld [vmem:[#allocation2 + $0x8] sm:$0xf]
    %v266 = vld [vmem:[#allocation2 + $0xc] sm:$0xf]
    %v267 = vld [vmem:[#allocation2 + $0x10] sm:$0xf]
    %v268 = vld [vmem:[#allocation2 + $0x14] sm:$0xf]
    %v269 = vld [vmem:[#allocation2 + $0x18] sm:$0xf]
    %v270 = vld [vmem:[#allocation2 + $0x1c] sm:$0xf]
    %v271 = vld [vmem:[#allocation2 + $0x20] sm:$0xf]
    %v272 = vld [vmem:[#allocation2 + $0x24] sm:$0xf]
    %v273 = vld [vmem:[#allocation2 + $0x28] sm:$0xf]
    %v274 = vld [vmem:[#allocation2 + $0x2c] sm:$0xf]
    %v275 = vunpack.c.l.bf16 %v251
    %v276 = vunpack.c.l.bf16 %v252
    %v277 = vunpack.c.l.bf16 %v253
    %v278 = vunpack.c.l.bf16 %v254
    %v279 = vunpack.c.l.bf16 %v255
    %v280 = vunpack.c.l.bf16 %v256
    %v281 = vunpack.c.l.bf16 %v257
    %v282 = vunpack.c.l.bf16 %v258
    %v283 = vunpack.c.l.bf16 %v259
    %v284 = vunpack.c.l.bf16 %v260
    %v285 = vunpack.c.l.bf16 %v261
    %v286 = vunpack.c.l.bf16 %v262
    %v287 = vunpack.c.l.bf16 %v263
    %v288 = vunpack.c.l.bf16 %v264
    %v289 = vunpack.c.l.bf16 %v265
    %v290 = vunpack.c.l.bf16 %v266
    %v291 = vunpack.c.l.bf16 %v267
    %v292 = vunpack.c.l.bf16 %v268
    %v293 = vunpack.c.l.bf16 %v269
    %v294 = vunpack.c.l.bf16 %v270
    %v295 = vunpack.c.l.bf16 %v271
    %v296 = vunpack.c.l.bf16 %v272
    %v297 = vunpack.c.l.bf16 %v273
    %v298 = vunpack.c.l.bf16 %v274
    %v299 = vmul.f32 %v275, %v287
    %v300 = vmul.f32 %v276, %v288
    %v301 = vmul.f32 %v277, %v289
    %v302 = vmul.f32 %v278, %v290
    %v303 = vmul.f32 %v279, %v291
    %v304 = vmul.f32 %v280, %v292
    %v305 = vmul.f32 %v281, %v293
    %v306 = vmul.f32 %v282, %v294
    %v307 = vmul.f32 %v283, %v295
    %v308 = vmul.f32 %v284, %v296
    %v309 = vmul.f32 %v285, %v297
    %v310 = vmul.f32 %v286, %v298
    %v311 = vpack.c.bf16 %v300, %v299
    %v312 = vpack.c.bf16 %v302, %v301
    %v313 = vpack.c.bf16 %v304, %v303
    %v314 = vpack.c.bf16 %v306, %v305
    %v315 = vpack.c.bf16 %v308, %v307
    %v316 = vpack.c.bf16 %v310, %v309
    %v317 = vld [vmem:[%s5] sm:$0xf]
    %v318 = vld [vmem:[%s5 + $0x4] sm:$0xf]
    %v319 = vld [vmem:[%s5 + $0x8] sm:$0xf]
    %v320 = vld [vmem:[%s5 + $0xc] sm:$0xf]
    %v325 = vunpack.c.l.b16 %v317
    %v326 = vunpack.c.l.b16 %v318
    %v327 = vunpack.c.l.b16 %v319
    %v328 = vunpack.c.l.b16 %v320
    %v329 = vpack.c.b16 %v326, %v325
    %v330 = vpack.c.b16 %v328, %v327
    %vm333 = vcmask 261120
    %v335 = vsel %vm333, %v311, 0
    %v338 = vsel %vm333, %v312, 0
    %v341 = vsel %vm333, %v313, 0
    %v344 = vsel %vm333, %v314, 0
    %v347 = vsel %vm333, %v315, 0
    %v350 = vsel %vm333, %v316, 0
    %352 = vmatpush.bf16.msra.mxu0 0
    %353 = vmatpush.bf16.msra.mxu0 0
    %354 = vmatpush.bf16.msra.mxu0 0
    %355 = vmatpush.bf16.msra.mxu0 0
    %356 = vmatpush.bf16.msra.mxu0 0
    %357 = vmatpush.bf16.msra.mxu0 0
    %358 = vmatpush.bf16.msra.mxu0 %v330
    %359 = vmatpush.bf16.msra.mxu0 %v329
    %360 = vmatmul.bf16.gmra.mxu0 %v335
    %v361 = vpop.f32.mrf.mxu0
    %v362 = vadd.f32 0.0, %v361
    %v363 = vpop.f32.mrf.mxu0
    %v364 = vadd.f32 0.0, %v363
    %365 = vmatmul.bf16.gmra.mxu0 %v338
    %v366 = vpop.f32.mrf.mxu0
    %v367 = vadd.f32 0.0, %v366
    %v368 = vpop.f32.mrf.mxu0
    %v369 = vadd.f32 0.0, %v368
    %370 = vmatmul.bf16.gmra.mxu0 %v341
    %v371 = vpop.f32.mrf.mxu0
    %v372 = vadd.f32 0.0, %v371
    %v373 = vpop.f32.mrf.mxu0
    %v374 = vadd.f32 0.0, %v373
    %375 = vmatmul.bf16.gmra.mxu0 %v344
    %v376 = vpop.f32.mrf.mxu0
    %v377 = vadd.f32 0.0, %v376
    %v378 = vpop.f32.mrf.mxu0
    %v379 = vadd.f32 0.0, %v378
    %380 = vmatmul.bf16.gmra.mxu0 %v347
    %v381 = vpop.f32.mrf.mxu0
    %v382 = vadd.f32 0.0, %v381
    %v383 = vpop.f32.mrf.mxu0
    %v384 = vadd.f32 0.0, %v383
    %385 = vmatmul.bf16.gmra.mxu0 %v350
    %v386 = vpop.f32.mrf.mxu0
    %v387 = vadd.f32 0.0, %v386
    %v388 = vpop.f32.mrf.mxu0
    %v389 = vadd.f32 0.0, %v388
    %390 = vdwg.mxu0
    %v391 = vadd.f32 %v362, %v367
    %v392 = vadd.f32 %v391, %v372
    %v393 = vadd.f32 %v392, %v377
    %v394 = vadd.f32 %v393, %v382
    %v395 = vadd.f32 %v394, %v387
    %v396 = vadd.f32 %v364, %v369
    %v397 = vadd.f32 %v396, %v374
    %v398 = vadd.f32 %v397, %v379
    %v399 = vadd.f32 %v398, %v384
    %v400 = vadd.f32 %v399, %v389
    %v401 = vld [vmem:[%s6] sm:$0x1]
    %v403 = vperm.slane %v401, 0
    %v405 = vadd.f32 %v395, %v403
    %v406 = vadd.f32 %v400, %v403
    %407 = vst [vmem:[#allocation5] sm:$0xff] %v405
    %408 = vst [vmem:[#allocation5 + $0x8] sm:$0xff] %v406
    // Predicated region
    $region34: #{tpu_custom_call.1} parent=1 // pred_check
      _
    $region35: #{tpu_custom_call.1} parent=1 // pred_check_branch
      %410 = sbr.rel (0) target = $region37
    $region36: #{tpu_custom_call.1} parent=1 // pred_region
      %412 = vsyncadd [#allocation4], 0
      %s413 = sshll.u32 [#allocation5], 4
      %s414 = int_to_ptr.vmem [resolvable:$true] %s413
      %s415 = sshll.u32 %s7, 4
      %s416 = int_to_ptr.hbm [resolvable:$true] %s415
      %421 = dma.vmem_to_hbm [thread:$0]  %s414, 256, %s416, [#allocation4], 128, 128, 8
    $region37: #{tpu_custom_call.1} parent=1 // pred_fallthru
      _
    // Predicated region
    $region38: #{tpu_custom_call.1} parent=1 // pred_check
      _
    $region39: #{tpu_custom_call.1} parent=1 // pred_check_branch
      %423 = sbr.rel (0) target = $region41
    $region40: #{tpu_custom_call.1} parent=1 // pred_region
      %425 = dma.done [#allocation4], 256
    $region41: #{tpu_custom_call.1} parent=1 // pred_fallthru
      _
    %426 = vsyncpa [#allocation3], 1
    %427 = vsyncpa [#allocation4], 1

</llo_original>
